<compile_context>
chip_gen: v7x
topology: tpu7x:2x2x1
jax: 0.10.0
libtpu: 0.0.40
codegen_flags: <defaults>
</compile_context>

<pallas_src>
import functools
import math

import jax
import jax.numpy as jnp
from jax.experimental import pallas as pl
from jax.experimental.pallas import tpu as pltpu


# --------------------------------------------------------------------------
# Tiled linear:  out = x @ w (+ b)
# --------------------------------------------------------------------------
def _linear_kernel(x_ref, w_ref, *rest, has_bias):
    if has_bias:
        b_ref, o_ref, acc_ref = rest
    else:
        b_ref = None
        o_ref, acc_ref = rest

    @pl.when(pl.program_id(2) == 0)
    def _():
        acc_ref[...] = jnp.zeros_like(acc_ref)

    acc_ref[...] += jnp.dot(
        x_ref[...], w_ref[...], preferred_element_type=jnp.float32
    )

    @pl.when(pl.program_id(2) == pl.num_programs(2) - 1)
    def _():
        acc = acc_ref[...]
        if has_bias:
            acc = acc + b_ref[...].astype(jnp.float32)
        o_ref[...] = acc.astype(o_ref.dtype)


def linear(x2, w, b=None, *, max_tm=512, max_tn=512):
    """x2: (N, K), w: (K, Dout), b: (Dout,) or None -> (N, Dout)."""
    N, K = x2.shape
    Dout = w.shape[1]

    # Full-extent blocks for small dims (no host padding); capped tiles otherwise.
    tm = N if N <= max_tm else max_tm          # max_tm multiple of 8
    tn = Dout if Dout <= max_tn else max_tn    # max_tn multiple of 128
    tk = K                                     # keep K un-tiled unless big & divisible
    for cand in (1024, 512, 256):
        if K > cand and K % cand == 0:
            tk = cand
            break

    grid = (pl.cdiv(N, tm), pl.cdiv(Dout, tn), K // tk)
    has_bias = b is not None

    in_specs = [
        pl.BlockSpec((tm, tk), lambda i, j, k: (i, k)),
        pl.BlockSpec((tk, tn), lambda i, j, k: (k, j)),
    ]
    args = [x2, w]
    if has_bias:
        in_specs.append(pl.BlockSpec((1, tn), lambda i, j, k: (0, j)))
        args.append(b.reshape(1, Dout))

    # VMEM budget: double-buffered input/output tiles + f32 accumulator.
    itemsize = jnp.dtype(x2.dtype).itemsize
    needed = 2 * (tm * tk + tk * tn + tm * tn) * itemsize + tm * tn * 4
    vmem_limit = int(min(48 * 2**20, max(16 * 2**20, int(needed * 1.5))))

    return pl.pallas_call(
        functools.partial(_linear_kernel, has_bias=has_bias),
        out_shape=jax.ShapeDtypeStruct((N, Dout), x2.dtype),
        grid_spec=pltpu.PrefetchScalarGridSpec(
            num_scalar_prefetch=0,
            grid=grid,
            in_specs=in_specs,
            out_specs=pl.BlockSpec((tm, tn), lambda i, j, k: (i, j)),
            scratch_shapes=[pltpu.VMEM((tm, tn), jnp.float32)],
        ),
        compiler_params=pltpu.CompilerParams(
            dimension_semantics=("parallel", "parallel", "arbitrary"),
            vmem_limit_bytes=vmem_limit,
        ),
    )(*args)


# --------------------------------------------------------------------------
# Scaled dot-product attention: one (batch, head-chunk) slice per grid step.
# --------------------------------------------------------------------------
def _attn_kernel(q_ref, k_ref, v_ref, o_ref, *, scale, causal):
    q = q_ref[0].astype(jnp.float32)   # (hb, T, d)
    k = k_ref[0].astype(jnp.float32)   # (hb, S, d)
    v = v_ref[0].astype(jnp.float32)   # (hb, S, d)

    # scores: (hb, T, S)
    s = jnp.einsum("htd,hsd->hts", q, k, preferred_element_type=jnp.float32)
    s = s * scale

    if causal:  # static flag; only traced when requested
        _, T, S = s.shape
        row = jax.lax.broadcasted_iota(jnp.int32, (T, S), 0)
        col = jax.lax.broadcasted_iota(jnp.int32, (T, S), 1)
        s = jnp.where((col <= row)[None, :, :], s, -1e30)

    m = jnp.max(s, axis=-1, keepdims=True)
    p = jnp.exp(s - m)
    l = jnp.sum(p, axis=-1, keepdims=True)
    o = jnp.einsum("hts,hsd->htd", p, v, preferred_element_type=jnp.float32)
    o = o * pl.reciprocal(l, approx=True)
    o_ref[0] = o.astype(o_ref.dtype)


def attention_core(q, k, v, *, causal=False):
    """q: (B, H, T, d), k/v: (B, H, S, d) -> (B, H, T, d)."""
    B, H, T, d = q.shape
    S = k.shape[2]
    scale = 1.0 / math.sqrt(d)

    # Pick heads-per-block (divisor of H) so the per-step f32 footprint is
    # modest; for small models this is all heads -> minimal grid overhead.
    def footprint(hb):
        return 4 * hb * (2 * T * d + 2 * S * d + T * S)  # q,o,k,v,scores (f32)

    hb = H
    budget = 8 * 2**20
    while hb > 1 and footprint(hb) > budget:
        hb -= 1
        while H % hb:
            hb -= 1

    grid = (B, H // hb)

    return pl.pallas_call(
        functools.partial(_attn_kernel, scale=scale, causal=causal),
        out_shape=jax.ShapeDtypeStruct((B, H, T, d), q.dtype),
        grid_spec=pltpu.PrefetchScalarGridSpec(
            num_scalar_prefetch=0,
            grid=grid,
            in_specs=[
                pl.BlockSpec((1, hb, T, d), lambda b, h: (b, h, 0, 0)),
                pl.BlockSpec((1, hb, S, d), lambda b, h: (b, h, 0, 0)),
                pl.BlockSpec((1, hb, S, d), lambda b, h: (b, h, 0, 0)),
            ],
            out_specs=pl.BlockSpec((1, hb, T, d), lambda b, h: (b, h, 0, 0)),
        ),
        compiler_params=pltpu.CompilerParams(
            dimension_semantics=("parallel", "parallel"),
            vmem_limit_bytes=min(48 * 2**20, max(16 * 2**20, 8 * footprint(hb))),
        ),
    )(q, k, v)


# --------------------------------------------------------------------------
# Full module forward.
# --------------------------------------------------------------------------
def mdt_attention(x, params, *, n_head, causal=False, context=None):
    """Forward of MDT Attention (eval mode). Weights stored as (in, out)."""
    B, T, C = x.shape
    d = C // n_head
    src = x if context is None else context
    S = src.shape[1]

    x2 = x.reshape(B * T, C)

    if context is None:
        # Fused QKV projection: one MXU pass over x.
        w_qkv = jnp.concatenate(
            [params["w_q"], params["w_k"], params["w_v"]], axis=1
        )  # (C, 3C)
        b_qkv = jnp.concatenate(
            [params["b_q"], params["b_k"], params["b_v"]], axis=0
        )  # (3C,)
        qkv = linear(x2, w_qkv, b_qkv)                 # (B*T, 3C)
        q2, k2, v2 = jnp.split(qkv, 3, axis=1)
    else:
        src2 = src.reshape(B * S, C)
        q2 = linear(x2, params["w_q"], params["b_q"])
        k2 = linear(src2, params["w_k"], params["b_k"])
        v2 = linear(src2, params["w_v"], params["b_v"])

    # split heads: (B, H, T/S, d)
    q = q2.reshape(B, T, n_head, d).transpose(0, 2, 1, 3)
    k = k2.reshape(B, S, n_head, d).transpose(0, 2, 1, 3)
    v = v2.reshape(B, S, n_head, d).transpose(0, 2, 1, 3)

    # TODO(synk): custom_attn_mask (additive/bool mask) not supported in-kernel;
    #             demo path uses attn_mask=None exactly like the module default.
    y = attention_core(q, k, v, causal=causal)         # (B, H, T, d)
    y = y.transpose(0, 2, 1, 3).reshape(B * T, C)

    # TODO(synk): attn_dropout / resid_dropout are identity in eval mode;
    #             training-mode dropout (pltpu PRNG) not implemented.
    out = linear(y, params["w_proj"], params["b_proj"])
    return out.reshape(B, T, C)


# --------------------------------------------------------------------------
# Pure-JAX reference
# --------------------------------------------------------------------------
def _reference_attention(x, params, *, n_head, causal=False, context=None):
    B, T, C = x.shape
    d = C // n_head
    src = x if context is None else context
    S = src.shape[1]

    q = (x @ params["w_q"] + params["b_q"]).reshape(B, T, n_head, d).transpose(0, 2, 1, 3)
    k = (src @ params["w_k"] + params["b_k"]).reshape(B, S, n_head, d).transpose(0, 2, 1, 3)
    v = (src @ params["w_v"] + params["b_v"]).reshape(B, S, n_head, d).transpose(0, 2, 1, 3)

    s = jnp.einsum("bhtd,bhsd->bhts", q, k) / math.sqrt(d)
    if causal:
        mask = jnp.tril(jnp.ones((T, S), dtype=bool))
        s = jnp.where(mask, s, -jnp.inf)
    p = jax.nn.softmax(s, axis=-1)
    y = jnp.einsum("bhts,bhsd->bhtd", p, v)
    y = y.transpose(0, 2, 1, 3).reshape(B, T, C)
    return y @ params["w_proj"] + params["b_proj"]


if __name__ == "__main__":
    key = jax.random.PRNGKey(0)
    B, T, C, H = 2, 8, 32, 4          # batch=2, seq=8, n_embd=32, n_head=4

    keys = jax.random.split(key, 9)
    x = jax.random.normal(keys[0], (B, T, C), dtype=jnp.float32)

    bound = 1.0 / math.sqrt(C)  # torch nn.Linear default init range

    def init_w(k):
        return jax.random.uniform(k, (C, C), jnp.float32, -bound, bound)

    def init_b(k):
        return jax.random.uniform(k, (C,), jnp.float32, -bound, bound)

    params = {
        "w_q": init_w(keys[1]), "b_q": init_b(keys[2]),
        "w_k": init_w(keys[3]), "b_k": init_b(keys[4]),
        "w_v": init_w(keys[5]), "b_v": init_b(keys[6]),
        "w_proj": init_w(keys[7]), "b_proj": init_b(keys[8]),
    }

    out = mdt_attention(x, params, n_head=H, causal=False)
    out = jax.block_until_ready(out)

    ref = _reference_attention(x, params, n_head=H, causal=False)
    assert out.shape == (B, T, C)
    max_err = float(jnp.max(jnp.abs(out - ref)))
    assert jnp.allclose(out, ref, atol=2e-2, rtol=2e-2), f"mismatch: max abs diff {max_err}"

    print("KERNEL_OK")
</pallas_src>

<mosaic_0001>
module attributes {stable_mosaic.version = 11 : i64} {
  func.func @_linear_kernel(%arg0: i32, %arg1: i32, %arg2: i32, %arg3: memref<16x32xf32, #tpu.memory_space<vmem>>, %arg4: memref<32x96xf32, #tpu.memory_space<vmem>>, %arg5: memref<1x96xf32, #tpu.memory_space<vmem>>, %arg6: memref<16x96xf32, #tpu.memory_space<vmem>>, %arg7: memref<16x96xf32, #tpu.memory_space<vmem>>) attributes {dimension_semantics = [#tpu.dimension_semantics<parallel>, #tpu.dimension_semantics<parallel>, #tpu.dimension_semantics<arbitrary>], iteration_bounds = array<i64: 1, 1, 1>, scalar_prefetch = 0 : i64, scratch_operands = 1 : i64, tpu.core_type = #tpu.core_type<tc>, window_params = [{transform_indices = @transform_0, window_bounds = array<i64: 16, 32>}, {transform_indices = @transform_1, window_bounds = array<i64: 32, 96>}, {transform_indices = @transform_2, window_bounds = array<i64: 1, 96>}, {transform_indices = @transform_3, window_bounds = array<i64: 16, 96>}]} {
    %c0_i32 = arith.constant 0 : i32
    %0 = arith.cmpi eq, %arg2, %c0_i32 : i32
    %1 = arith.extui %0 : i1 to i32
    %c0_i32_0 = arith.constant 0 : i32
    %2 = arith.cmpi ne, %1, %c0_i32_0 : i32
    scf.if %2 {
      %cst_10 = arith.constant 0.000000e+00 : f32
      %12 = vector.broadcast %cst_10 : f32 to vector<16x96xf32>
      %c0_11 = arith.constant 0 : index
      %c0_12 = arith.constant 0 : index
      %13 = vector.load %arg7[%c0_11, %c0_12] : memref<16x96xf32, #tpu.memory_space<vmem>>, vector<16x96xf32>
      tpu.vector_store %arg7[%c0_11, %c0_12], %12 {strides = array<i32>} : memref<16x96xf32, #tpu.memory_space<vmem>>, vector<16x96xf32>,
    } else {
    }
    %c0 = arith.constant 0 : index
    %c0_1 = arith.constant 0 : index
    %3 = vector.load %arg7[%c0, %c0_1] : memref<16x96xf32, #tpu.memory_space<vmem>>, vector<16x96xf32>
    %c0_2 = arith.constant 0 : index
    %c0_3 = arith.constant 0 : index
    %4 = vector.load %arg3[%c0_2, %c0_3] : memref<16x32xf32, #tpu.memory_space<vmem>>, vector<16x32xf32>
    %c0_4 = arith.constant 0 : index
    %c0_5 = arith.constant 0 : index
    %5 = vector.load %arg4[%c0_4, %c0_5] : memref<32x96xf32, #tpu.memory_space<vmem>>, vector<32x96xf32>
    %cst = arith.constant dense<0.000000e+00> : vector<16x96xf32>
    %6 = tpu.matmul %4, %5, %cst {dimension_numbers = #tpu.dot_dimension_numbers<[1], [0], [0], [1], [0, 0, 1, 1], [], []>} : vector<16x32xf32>, vector<32x96xf32>, vector<16x96xf32> -> vector<16x96xf32>
    %7 = arith.addf %3, %6 : vector<16x96xf32>
    %c0_6 = arith.constant 0 : index
    %c0_7 = arith.constant 0 : index
    %8 = vector.load %arg7[%c0_6, %c0_7] : memref<16x96xf32, #tpu.memory_space<vmem>>, vector<16x96xf32>
    tpu.vector_store %arg7[%c0_6, %c0_7], %7 {strides = array<i32>} : memref<16x96xf32, #tpu.memory_space<vmem>>, vector<16x96xf32>,
    %c0_i32_8 = arith.constant 0 : i32
    %9 = arith.cmpi eq, %arg2, %c0_i32_8 : i32
    %10 = arith.extui %9 : i1 to i32
    %c0_i32_9 = arith.constant 0 : i32
    %11 = arith.cmpi ne, %10, %c0_i32_9 : i32
    scf.if %11 {
      %c0_10 = arith.constant 0 : index
      %c0_11 = arith.constant 0 : index
      %12 = vector.load %arg7[%c0_10, %c0_11] : memref<16x96xf32, #tpu.memory_space<vmem>>, vector<16x96xf32>
      %c0_12 = arith.constant 0 : index
      %c0_13 = arith.constant 0 : index
      %13 = vector.load %arg5[%c0_12, %c0_13] : memref<1x96xf32, #tpu.memory_space<vmem>>, vector<1x96xf32>
      %14 = vector.broadcast %13 : vector<1x96xf32> to vector<16x96xf32>
      %15 = arith.addf %12, %14 : vector<16x96xf32>
      %c0_14 = arith.constant 0 : index
      %c0_15 = arith.constant 0 : index
      %16 = vector.load %arg6[%c0_14, %c0_15] : memref<16x96xf32, #tpu.memory_space<vmem>>, vector<16x96xf32>
      tpu.vector_store %arg6[%c0_14, %c0_15], %15 {strides = array<i32>} : memref<16x96xf32, #tpu.memory_space<vmem>>, vector<16x96xf32>,
    } else {
    }
    return
  }
  func.func @transform_0(%arg0: i32, %arg1: i32, %arg2: i32) -> (i32, i32) {
    %c0_i32 = arith.constant 0 : i32
    return %arg0, %arg2 : i32, i32
  }
  func.func @transform_1(%arg0: i32, %arg1: i32, %arg2: i32) -> (i32, i32) {
    %c0_i32 = arith.constant 0 : i32
    return %arg2, %arg1 : i32, i32
  }
  func.func @transform_2(%arg0: i32, %arg1: i32, %arg2: i32) -> (i32, i32) {
    %c0_i32 = arith.constant 0 : i32
    %c0_i32_0 = arith.constant 0 : i32
    return %c0_i32, %arg1 : i32, i32
  }
  func.func @transform_3(%arg0: i32, %arg1: i32, %arg2: i32) -> (i32, i32) {
    %c0_i32 = arith.constant 0 : i32
    return %arg0, %arg1 : i32, i32
  }
}

</mosaic_0001>

<llo_original>
// kernel: tpu_custom_call.1
$region0: #{tpu_custom_call.1}
  #allocation0 [shape = 'u32[]', space=smem, size = 0x4, offset = 0x4, fixed_abs, tag = 'smem constant byte address 0x4 - core index']
  #allocation1 [shape = 'u32[144,128]{1,0:T(1,128)}', space=vmem, size = 0x12000, scoped, tag = 'internal scratch']
  #allocation2 [shape = 'f32[16,96]{1,0:T(8,128)}', space=vmem, size = 0x2000, scoped, tag = 'scratch operand']
  %s0 = inlined_call_operand.hbm [shape: f32[16,32], index: 0, kind: input, shape index: {}]
  %s1 = inlined_call_operand.hbm [shape: f32[32,96], index: 1, kind: input, shape index: {}]
  %s2 = inlined_call_operand.vmem [shape: f32[1,96], index: 2, kind: input, shape index: {}]
  %s3 = inlined_call_operand.hbm [shape: f32[16,96], index: 3, kind: output, shape index: {}]
  %s4 = sld [smem:[#allocation0]]
  $region38: #{tpu_custom_call.1} parent=0
    _
  %s6 = ssub.s32 1, %s4
  %s7 = scalar_select 0, %s6, %s4
  $region1: #{tpu_custom_call.1} parent=0
    #allocation3 [shape = 'u8[8192]{0}', space=vmem, size = 0x2000, scoped, tag = 'input window, operand 0, single buffered']
    #allocation4 [shape = 's32[1]{0}', space=sflag, size = 0x4, scoped, tag = 'scoped memory for tpu_custom_call.1']
    #allocation5 [shape = 's32[1]{0}', space=sflag, size = 0x4, scoped, tag = 'scoped memory for tpu_custom_call.1']
    #allocation6 [shape = 'u8[16384]{0}', space=vmem, size = 0x4000, scoped, tag = 'input window, operand 1, single buffered']
    #allocation7 [shape = 's32[1]{0}', space=sflag, size = 0x4, scoped, tag = 'scoped memory for tpu_custom_call.1']
    #allocation8 [shape = 'u8[8192]{0}', space=vmem, size = 0x2000, scoped, tag = 'output window, operand 0, single buffered']
    %8 = vsyncpa [#allocation4], 0
    %9 = vsyncpa [#allocation7], 0
    %10 = vsyncpa [#allocation5], 0
    // Predicated region
    $region2: #{tpu_custom_call.1} parent=1 // pred_check
      _
    $region3: #{tpu_custom_call.1} parent=1 // pred_check_branch
      %12 = sbr.rel (0) target = $region5
    $region4: #{tpu_custom_call.1} parent=1 // pred_region
      %s14 = ssub.s32 256, 256
      %15 = vsyncadd [#allocation4], %s14
      %s16 = sshll.u32 [#allocation3], 4
      %s17 = int_to_ptr.vmem [resolvable:$true] %s16
      %22 = dma.hbm_to_vmem [thread:$0]  %s0, 256, %s17, [#allocation4], 128, 128, 8
    $region5: #{tpu_custom_call.1} parent=1 // pred_fallthru
      _
    // Predicated region
    $region6: #{tpu_custom_call.1} parent=1 // pred_check
      _
    $region7: #{tpu_custom_call.1} parent=1 // pred_check_branch
      %24 = sbr.rel (0) target = $region9
    $region8: #{tpu_custom_call.1} parent=1 // pred_region
      %s26 = ssub.s32 512, 512
      %27 = vsyncadd [#allocation7], %s26
      %s28 = sshll.u32 [#allocation6], 4
      %s29 = int_to_ptr.vmem [resolvable:$true] %s28
      %34 = dma.hbm_to_vmem [thread:$0]  %s1, 512, %s29, [#allocation7], 128, 128, 8
    $region9: #{tpu_custom_call.1} parent=1 // pred_fallthru
      _
    // Predicated region
    $region10: #{tpu_custom_call.1} parent=1 // pred_check
      _
    $region11: #{tpu_custom_call.1} parent=1 // pred_check_branch
      %36 = sbr.rel (0) target = $region13
    $region12: #{tpu_custom_call.1} parent=1 // pred_region
      _
    $region13: #{tpu_custom_call.1} parent=1 // pred_fallthru
      _
    // Predicated region
    $region14: #{tpu_custom_call.1} parent=1 // pred_check
      _
    $region15: #{tpu_custom_call.1} parent=1 // pred_check_branch
      %38 = sbr.rel (0) target = $region17
    $region16: #{tpu_custom_call.1} parent=1 // pred_region
      %39 = dma.done [#allocation4], 256
    $region17: #{tpu_custom_call.1} parent=1 // pred_fallthru
      _
    // Predicated region
    $region18: #{tpu_custom_call.1} parent=1 // pred_check
      _
    $region19: #{tpu_custom_call.1} parent=1 // pred_check_branch
      %41 = sbr.rel (0) target = $region21
    $region20: #{tpu_custom_call.1} parent=1 // pred_region
      %42 = dma.done [#allocation7], 512
    $region21: #{tpu_custom_call.1} parent=1 // pred_fallthru
      _
    %p43 = scmp.eq.s32.totalorder 0, 0
    // Predicated region
    $region22: #{tpu_custom_call.1} parent=1 // pred_check
      %p44 = pneg %p43
    $region23: #{tpu_custom_call.1} parent=1 // pred_check_branch
      %46 = sbr.rel (%p44) target = $region25
    $region24: #{tpu_custom_call.1} parent=1 // pred_region
      %vm47 = vcmask 785408
      %48 = vst.msk [vmem:[#allocation2] sm:$0xff] %vm47, 0.0
      %49 = vst.msk [vmem:[#allocation2 + $0x8] sm:$0xff] %vm47, 0.0
    $region25: #{tpu_custom_call.1} parent=1 // pred_fallthru
      _
    %v50 = vld [vmem:[#allocation2] sm:$0xff]
    %v51 = vld [vmem:[#allocation2 + $0x8] sm:$0xff]
    %v52 = vld [vmem:[#allocation3] sm:$0xff]
    %v53 = vld [vmem:[#allocation3 + $0x8] sm:$0xff]
    %v54 = vld [vmem:[#allocation6] sm:$0xff]
    %v55 = vld [vmem:[#allocation6 + $0x8] sm:$0xff]
    %v56 = vld [vmem:[#allocation6 + $0x10] sm:$0xff]
    %v57 = vld [vmem:[#allocation6 + $0x18] sm:$0xff]
    %vm58 = vcmask 261120
    %v60 = vsel %vm58, %v52, 0
    %v63 = vsel %vm58, %v53, 0
    %65 = vmatprep.subr.mxu0 0.0
    %66 = vmatpush1.msra.mxu0 %v54
    %67 = vmatprep.subr.mxu0 0.0
    %68 = vmatpush1.msra.mxu0 %v55
    %69 = vmatprep.subr.mxu0 0.0
    %70 = vmatpush1.msra.mxu0 %v56
    %71 = vmatprep.subr.mxu0 0.0
    %72 = vmatpush1.msra.mxu0 %v57
    %73 = vmatprep.subr.mxu0 0.0
    %74 = vmatpush1.msra.mxu0 0.0
    %75 = vmatprep.subr.mxu0 0.0
    %76 = vmatpush1.msra.mxu0 0.0
    %77 = vmatprep.subr.mxu0 0.0
    %78 = vmatpush1.msra.mxu0 0.0
    %79 = vmatprep.subr.mxu0 0.0
    %80 = vmatpush1.msra.mxu0 0.0
    %81 = vmatprep.subr.mxu0 0.0
    %82 = vmatpush1.msra.mxu0 0.0
    %83 = vmatprep.subr.mxu0 0.0
    %84 = vmatpush1.msra.mxu0 0.0
    %85 = vmatprep.subr.mxu0 0.0
    %86 = vmatpush1.msra.mxu0 0.0
    %87 = vmatprep.subr.mxu0 0.0
    %88 = vmatpush1.msra.mxu0 0.0
    %89 = vmatprep.subr.mxu0 0.0
    %90 = vmatpush1.msra.mxu0 0.0
    %91 = vmatprep.subr.mxu0 0.0
    %92 = vmatpush1.msra.mxu0 0.0
    %93 = vmatprep.subr.mxu0 0.0
    %94 = vmatpush1.msra.mxu0 0.0
    %95 = vmatprep.subr.mxu0 0.0
    %96 = vmatpush1.msra.mxu0 0.0
    %97 = vmatprep.subr.mxu0 0.0
    %98 = vmatpush1.msra.mxu0 0.0
    %99 = vmatprep.subr.mxu0 0.0
    %100 = vmatpush1.msra.mxu0 0.0
    %101 = vmatprep.subr.mxu0 0.0
    %102 = vmatpush1.msra.mxu0 0.0
    %103 = vmatprep.subr.mxu0 0.0
    %104 = vmatpush1.msra.mxu0 0.0
    %105 = vmatprep.subr.mxu0 0.0
    %106 = vmatpush1.msra.mxu0 0.0
    %107 = vmatprep.subr.mxu0 0.0
    %108 = vmatpush1.msra.mxu0 0.0
    %109 = vmatprep.subr.mxu0 0.0
    %110 = vmatpush1.msra.mxu0 0.0
    %111 = vmatprep.subr.mxu0 0.0
    %112 = vmatpush1.msra.mxu0 0.0
    %113 = vmatprep.subr.mxu0 0.0
    %114 = vmatpush1.msra.mxu0 0.0
    %115 = vmatprep.subr.mxu0 0.0
    %116 = vmatpush1.msra.mxu0 0.0
    %117 = vmatprep.subr.mxu0 0.0
    %118 = vmatpush1.msra.mxu0 0.0
    %119 = vmatprep.subr.mxu0 0.0
    %120 = vmatpush1.msra.mxu0 0.0
    %121 = vmatprep.subr.mxu0 0.0
    %122 = vmatpush1.msra.mxu0 0.0
    %123 = vmatprep.subr.mxu0 0.0
    %124 = vmatpush1.msra.mxu0 0.0
    %125 = vmatprep.subr.mxu0 0.0
    %126 = vmatpush1.msra.mxu0 0.0
    %127 = vmatprep.subr.mxu0 0.0
    %128 = vmatpush1.msra.mxu0 0.0
    %129 = vmatprep.mubr.f32.mxu0 0.0
    %130 = vmatmul.mubr.f32.gmra.mrb[0].mxu0 %v60
    %v131 = vpop.f32.mrb[0].mxu0
    %v132 = vadd.f32 0.0, %v131
    %v133 = vpop.f32.mrb[0].mxu0
    %134 = vmatprep.mubr.f32.mxu0 0.0
    %135 = vmatmul.mubr.f32.gmra.mrb[0].mxu0 %v63
    %v136 = vpop.f32.mrb[0].mxu0
    %v137 = vadd.f32 0.0, %v136
    %v138 = vpop.f32.mrb[0].mxu0
    %139 = vdwg.mxu0
    %v140 = vadd.f32 %v50, %v132
    %v141 = vadd.f32 %v51, %v137
    %vm142 = vcmask 785408
    %143 = vst.msk [vmem:[#allocation2] sm:$0xff] %vm142, %v140
    %144 = vst.msk [vmem:[#allocation2 + $0x8] sm:$0xff] %vm142, %v141
    // Predicated region
    $region26: #{tpu_custom_call.1} parent=1 // pred_check
      %p145 = pneg %p43
    $region27: #{tpu_custom_call.1} parent=1 // pred_check_branch
      %147 = sbr.rel (%p145) target = $region29
    $region28: #{tpu_custom_call.1} parent=1 // pred_region
      %v148 = vld [vmem:[#allocation2] sm:$0xff]
      %v149 = vld [vmem:[#allocation2 + $0x8] sm:$0xff]
      %v150 = vld [vmem:[%s2] sm:$0x1]
      %v152 = vlaneseq
      %v153 = vshrl.u32 %v152, 7
      %v154 = vsub.s32 0, %v153
      %v155 = vrot.slane %v150, %v154
      %v157 = vadd.f32 %v148, %v155
      %v158 = vadd.f32 %v149, %v155
      %159 = vst.msk [vmem:[#allocation8] sm:$0xff] %vm142, %v157
      %160 = vst.msk [vmem:[#allocation8 + $0x8] sm:$0xff] %vm142, %v158
    $region29: #{tpu_custom_call.1} parent=1 // pred_fallthru
      _
    // Predicated region
    $region30: #{tpu_custom_call.1} parent=1 // pred_check
      _
    $region31: #{tpu_custom_call.1} parent=1 // pred_check_branch
      %162 = sbr.rel (0) target = $region33
    $region32: #{tpu_custom_call.1} parent=1 // pred_region
      %s164 = ssub.s32 256, 256
      %165 = vsyncadd [#allocation5], %s164
      %s166 = sshll.u32 [#allocation8], 4
      %s167 = int_to_ptr.vmem [resolvable:$true] %s166
      %172 = dma.vmem_to_hbm [thread:$0]  %s167, 256, %s3, [#allocation5], 128, 128, 8
    $region33: #{tpu_custom_call.1} parent=1 // pred_fallthru
      _
    // Predicated region
    $region34: #{tpu_custom_call.1} parent=1 // pred_check
      _
    $region35: #{tpu_custom_call.1} parent=1 // pred_check_branch
      %174 = sbr.rel (0) target = $region37
    $region36: #{tpu_custom_call.1} parent=1 // pred_region
      %175 = dma.done [#allocation5], 256
    $region37: #{tpu_custom_call.1} parent=1 // pred_fallthru
      _
    %176 = vsyncpa [#allocation4], 1
    %177 = vsyncpa [#allocation7], 1
    %178 = vsyncpa [#allocation5], 1

</llo_original>
